<compile_context>
chip_gen: v5e
topology: v5e:2x2
jax: 0.10.0
libtpu: 0.0.40
codegen_flags: <defaults>
</compile_context>

<pallas_src>
import jax
import jax.numpy as jnp
from jax.experimental import pallas as pl
from jax.experimental.pallas import tpu as pltpu


def _round_up(x, d):
    return ((x + d - 1) // d) * d


def _pick_tk(k, max_tk=2048):
    """K-tile: full K when small; else the largest 128-multiple divisor <= max_tk."""
    if k <= max_tk:
        return k
    for tk in (2048, 1536, 1024, 768, 512, 384, 256, 128):
        if tk <= max_tk and k % tk == 0:
            return tk
    return k  # fallback: single (unaligned) full-K step


def _cdown_kernel(pr_ref, pi_ref, wt_ref, wb_ref, b_ref, o_ref, acc_ref):
    """One (tm, tk) step of [Pr | Pi] @ [[Wr, Wi], [-Wi, Wr]] + bias, complex ReLU.

    acc += Pr_blk @ Wtop_blk + Pi_blk @ Wbot_blk   (bf16 inputs, fp32 MXU accumulation)
    Last K step: fp32 bias + ReLU epilogue, one cast-to-bf16 lane-contiguous store.
    """
    kk = pl.program_id(1)

    @pl.when(kk == 0)
    def _():
        acc_ref[...] = jnp.zeros_like(acc_ref)

    acc_ref[...] += (
        jnp.dot(pr_ref[...], wt_ref[...], preferred_element_type=jnp.float32)
        + jnp.dot(pi_ref[...], wb_ref[...], preferred_element_type=jnp.float32))

    @pl.when(kk == pl.num_programs(1) - 1)
    def _():
        # fp32 epilogue (bias + complex_relu), cast only at the store.
        o_ref[...] = jnp.maximum(acc_ref[...] + b_ref[...], 0.0).astype(o_ref.dtype)


def _im2col_k3_s2_p1(x_nhwc, oh, ow):
    """Extract 3x3 / stride-2 / pad-1 patches. Returns (N*OH*OW, 9*C)."""
    xp = jnp.pad(x_nhwc, ((0, 0), (1, 1), (1, 1), (0, 0)))
    taps = []
    for dy in range(3):
        for dx in range(3):
            taps.append(xp[:, dy:dy + 2 * oh:2, dx:dx + 2 * ow:2, :])
    p = jnp.stack(taps, axis=3)                       # (N, OH, OW, 9, C)
    n, _, _, _, c = p.shape
    return p.reshape(n * oh * ow, 9 * c)


def cdown_forward(xr, xi, wr, wi, br, bi, *, tm=512, out_dtype=jnp.bfloat16):
    """CDown forward.

    xr, xi : (N, C_in, H, W)   real/imag parts of the complex input (PyTorch NCHW).
    wr, wi : (C_out, C_in, 3, 3) real/imag conv weights (conv_r / conv_i).
    br, bi : (C_out,)          biases of conv_r / conv_i.
    Returns (out_real, out_imag), each (N, C_out, OH, OW), dtype `out_dtype`.
    (tm can be swept up to 1024-2048 on v5e/v6e; 512 keeps v7x's 64 MiB VMEM safe.)
    """
    n, cin, h, w = xr.shape
    cout = wr.shape[0]
    oh = (h + 2 - 3) // 2 + 1
    ow = (w + 2 - 3) // 2 + 1
    k = 9 * cin
    m = n * oh * ow
    nc = 2 * cout

    # --- patch matrices Pr, Pi kept separate (no (M, 2K) concat copy in HBM) ---
    xr_nhwc = jnp.transpose(xr, (0, 2, 3, 1)).astype(jnp.bfloat16)
    xi_nhwc = jnp.transpose(xi, (0, 2, 3, 1)).astype(jnp.bfloat16)
    pr = _im2col_k3_s2_p1(xr_nhwc, oh, ow)            # (M, K)
    pi = _im2col_k3_s2_p1(xi_nhwc, oh, ow)            # (M, K)

    # --- fused complex weights, split by patch half (small tensors, cheap) ---
    # real = Pr@Wr - Pi@Wi ; imag = Pr@Wi + Pi@Wr   (apply_complex semantics)
    wmr = jnp.transpose(wr, (2, 3, 1, 0)).reshape(k, cout)
    wmi = jnp.transpose(wi, (2, 3, 1, 0)).reshape(k, cout)
    w_top = jnp.concatenate([wmr, wmi], axis=1).astype(jnp.bfloat16)   # pairs with Pr
    w_bot = jnp.concatenate([-wmi, wmr], axis=1).astype(jnp.bfloat16)  # pairs with Pi
    b_cat = jnp.concatenate([br - bi, br + bi]).astype(jnp.float32)    # (2*C_out,)

    # --- output lane width: pad to 128-multiple only when it does not inflate I/O ---
    np_out = _round_up(nc, 128) if nc >= 128 else nc

    # --- K tiling (bounds per-step VMEM at large C_in; 1 step when K is small) ---
    tk = _pick_tk(k)
    kt = k // tk

    # --- M tiling: aim for >= 4 grid steps (megacore + pipelining), multiple of 8 ---
    tm = max(8, min(tm, _round_up(-(-m // 4), 8)))
    m_pad = _round_up(m, tm)
    if m_pad != m:
        pr = jnp.pad(pr, ((0, m_pad - m), (0, 0)))
        pi = jnp.pad(pi, ((0, m_pad - m), (0, 0)))

    if np_out != nc:
        w_top = jnp.pad(w_top, ((0, 0), (0, np_out - nc)))
        w_bot = jnp.pad(w_bot, ((0, 0), (0, np_out - nc)))
        b_cat = jnp.pad(b_cat, (0, np_out - nc))
    b_cat = b_cat.reshape(1, np_out)

    # --- VMEM budget: double-buffered inputs + bf16 output + fp32 accumulator ---
    est = (2 * 2 * tm * tk * 2            # Pr, Pi blocks (bf16, double-buffered)
           + 2 * 2 * tk * np_out * 2      # W_top, W_bot blocks
           + 2 * np_out * 4               # bias
           + 2 * tm * np_out * 2          # output block (bf16)
           + tm * np_out * 4)             # fp32 accumulator scratch
    vmem_limit = min(96 * 1024 * 1024, max(32 * 1024 * 1024, int(est * 1.25)))

    out = pl.pallas_call(
        _cdown_kernel,
        out_shape=jax.ShapeDtypeStruct((m_pad, np_out), out_dtype),
        grid=(m_pad // tm, kt),
        in_specs=[
            pl.BlockSpec((tm, tk), lambda i, kk: (i, kk)),       # Pr tile
            pl.BlockSpec((tm, tk), lambda i, kk: (i, kk)),       # Pi tile
            pl.BlockSpec((tk, np_out), lambda i, kk: (kk, 0)),   # W_top K-slab
            pl.BlockSpec((tk, np_out), lambda i, kk: (kk, 0)),   # W_bot K-slab
            pl.BlockSpec((1, np_out), lambda i, kk: (0, 0)),     # fused bias (resident)
        ],
        out_specs=pl.BlockSpec((tm, np_out), lambda i, kk: (i, 0)),
        scratch_shapes=[pltpu.VMEM((tm, np_out), jnp.float32)],
        compiler_params=pltpu.CompilerParams(
            dimension_semantics=("parallel", "arbitrary"),
            vmem_limit_bytes=vmem_limit,
        ),
    )(pr, pi, w_top, w_bot, b_cat)

    # --- slice off M / lane padding; split [real | imag]; back to NCHW (module API) ---
    out = out[:m, :nc].reshape(n, oh, ow, nc)
    out_r = jnp.transpose(out[..., :cout], (0, 3, 1, 2))
    out_i = jnp.transpose(out[..., cout:], (0, 3, 1, 2))
    return out_r, out_i


# ----------------------------- reference (pure XLA) -----------------------------
def _ref_conv_nchw(x, w, b):
    y = jax.lax.conv_general_dilated(
        x, w, window_strides=(2, 2), padding=((1, 1), (1, 1)),
        dimension_numbers=("NCHW", "OIHW", "NCHW"))
    return y + b[None, :, None, None]


def _ref_cdown(xr, xi, wr, wi, br, bi):
    real = _ref_conv_nchw(xr, wr, br) - _ref_conv_nchw(xi, wi, bi)
    imag = _ref_conv_nchw(xi, wr, br) + _ref_conv_nchw(xr, wi, bi)
    return jnp.maximum(real, 0.0), jnp.maximum(imag, 0.0)


if __name__ == "__main__":
    key = jax.random.PRNGKey(0)
    k_xr, k_xi, k_wr, k_wi, k_br, k_bi = jax.random.split(key, 6)

    N, C_IN, C_OUT, H, W = 2, 4, 8, 16, 16

    xr = jax.random.normal(k_xr, (N, C_IN, H, W), dtype=jnp.float32)
    xi = jax.random.normal(k_xi, (N, C_IN, H, W), dtype=jnp.float32)
    wr = 0.1 * jax.random.normal(k_wr, (C_OUT, C_IN, 3, 3), dtype=jnp.float32)
    wi = 0.1 * jax.random.normal(k_wi, (C_OUT, C_IN, 3, 3), dtype=jnp.float32)
    br = 0.05 * jax.random.normal(k_br, (C_OUT,), dtype=jnp.float32)
    bi = 0.05 * jax.random.normal(k_bi, (C_OUT,), dtype=jnp.float32)

    out_r, out_i = jax.jit(cdown_forward)(xr, xi, wr, wi, br, bi)
    jax.block_until_ready((out_r, out_i))

    ref_r, ref_i = _ref_cdown(xr, xi, wr, wi, br, bi)
    assert out_r.shape == (N, C_OUT, 8, 8) and out_i.shape == (N, C_OUT, 8, 8)
    # bf16 MXU inputs + bf16 output (fp32 accumulation) -> relaxed tolerance vs fp32 ref.
    assert jnp.allclose(out_r.astype(jnp.float32), ref_r, atol=3e-2, rtol=3e-2)
    assert jnp.allclose(out_i.astype(jnp.float32), ref_i, atol=3e-2, rtol=3e-2)

    print("KERNEL_OK")
</pallas_src>

<mosaic_0001>
module attributes {stable_mosaic.version = 11 : i64} {
  func.func @_cdown_kernel(%arg0: i32, %arg1: i32, %arg2: memref<32x36xbf16, #tpu.memory_space<vmem>>, %arg3: memref<32x36xbf16, #tpu.memory_space<vmem>>, %arg4: memref<36x16xbf16, #tpu.memory_space<vmem>>, %arg5: memref<36x16xbf16, #tpu.memory_space<vmem>>, %arg6: memref<1x16xf32, #tpu.memory_space<vmem>>, %arg7: memref<32x16xbf16, #tpu.memory_space<vmem>>, %arg8: memref<32x16xf32, #tpu.memory_space<vmem>>) attributes {dimension_semantics = [#tpu.dimension_semantics<parallel>, #tpu.dimension_semantics<arbitrary>], iteration_bounds = array<i64: 4, 1>, scalar_prefetch = 0 : i64, scratch_operands = 1 : i64, tpu.core_type = #tpu.core_type<tc>, window_params = [{transform_indices = @transform_0, window_bounds = array<i64: 32, 36>}, {transform_indices = @transform_1, window_bounds = array<i64: 32, 36>}, {transform_indices = @transform_2, window_bounds = array<i64: 36, 16>}, {transform_indices = @transform_3, window_bounds = array<i64: 36, 16>}, {pipeline_mode = #tpu.pipeline_mode<synchronous>, transform_indices = @transform_4, window_bounds = array<i64: 1, 16>}, {transform_indices = @transform_5, window_bounds = array<i64: 32, 16>}]} {
    %c0_i32 = arith.constant 0 : i32
    %0 = arith.cmpi eq, %arg1, %c0_i32 : i32
    %1 = arith.extui %0 : i1 to i32
    %c0_i32_0 = arith.constant 0 : i32
    %2 = arith.cmpi ne, %1, %c0_i32_0 : i32
    scf.if %2 {
      %cst_15 = arith.constant 0.000000e+00 : f32
      %16 = vector.broadcast %cst_15 : f32 to vector<32x16xf32>
      %c0_16 = arith.constant 0 : index
      %c0_17 = arith.constant 0 : index
      %17 = vector.load %arg8[%c0_16, %c0_17] : memref<32x16xf32, #tpu.memory_space<vmem>>, vector<32x16xf32>
      tpu.vector_store %arg8[%c0_16, %c0_17], %16 {strides = array<i32>} : memref<32x16xf32, #tpu.memory_space<vmem>>, vector<32x16xf32>,
    } else {
    }
    %c0 = arith.constant 0 : index
    %c0_1 = arith.constant 0 : index
    %3 = vector.load %arg8[%c0, %c0_1] : memref<32x16xf32, #tpu.memory_space<vmem>>, vector<32x16xf32>
    %c0_2 = arith.constant 0 : index
    %c0_3 = arith.constant 0 : index
    %4 = vector.load %arg2[%c0_2, %c0_3] : memref<32x36xbf16, #tpu.memory_space<vmem>>, vector<32x36xbf16>
    %c0_4 = arith.constant 0 : index
    %c0_5 = arith.constant 0 : index
    %5 = vector.load %arg4[%c0_4, %c0_5] : memref<36x16xbf16, #tpu.memory_space<vmem>>, vector<36x16xbf16>
    %cst = arith.constant dense<0.000000e+00> : vector<32x16xf32>
    %6 = tpu.matmul %4, %5, %cst {dimension_numbers = #tpu.dot_dimension_numbers<[1], [0], [0], [1], [0, 0, 1, 1], [], []>} : vector<32x36xbf16>, vector<36x16xbf16>, vector<32x16xf32> -> vector<32x16xf32>
    %c0_6 = arith.constant 0 : index
    %c0_7 = arith.constant 0 : index
    %7 = vector.load %arg3[%c0_6, %c0_7] : memref<32x36xbf16, #tpu.memory_space<vmem>>, vector<32x36xbf16>
    %c0_8 = arith.constant 0 : index
    %c0_9 = arith.constant 0 : index
    %8 = vector.load %arg5[%c0_8, %c0_9] : memref<36x16xbf16, #tpu.memory_space<vmem>>, vector<36x16xbf16>
    %cst_10 = arith.constant dense<0.000000e+00> : vector<32x16xf32>
    %9 = tpu.matmul %7, %8, %cst_10 {dimension_numbers = #tpu.dot_dimension_numbers<[1], [0], [0], [1], [0, 0, 1, 1], [], []>} : vector<32x36xbf16>, vector<36x16xbf16>, vector<32x16xf32> -> vector<32x16xf32>
    %10 = arith.addf %6, %9 : vector<32x16xf32>
    %11 = arith.addf %3, %10 : vector<32x16xf32>
    %c0_11 = arith.constant 0 : index
    %c0_12 = arith.constant 0 : index
    %12 = vector.load %arg8[%c0_11, %c0_12] : memref<32x16xf32, #tpu.memory_space<vmem>>, vector<32x16xf32>
    tpu.vector_store %arg8[%c0_11, %c0_12], %11 {strides = array<i32>} : memref<32x16xf32, #tpu.memory_space<vmem>>, vector<32x16xf32>,
    %c0_i32_13 = arith.constant 0 : i32
    %13 = arith.cmpi eq, %arg1, %c0_i32_13 : i32
    %14 = arith.extui %13 : i1 to i32
    %c0_i32_14 = arith.constant 0 : i32
    %15 = arith.cmpi ne, %14, %c0_i32_14 : i32
    scf.if %15 {
      %c0_15 = arith.constant 0 : index
      %c0_16 = arith.constant 0 : index
      %16 = vector.load %arg8[%c0_15, %c0_16] : memref<32x16xf32, #tpu.memory_space<vmem>>, vector<32x16xf32>
      %c0_17 = arith.constant 0 : index
      %c0_18 = arith.constant 0 : index
      %17 = vector.load %arg6[%c0_17, %c0_18] : memref<1x16xf32, #tpu.memory_space<vmem>>, vector<1x16xf32>
      %18 = vector.broadcast %17 : vector<1x16xf32> to vector<32x16xf32>
      %19 = arith.addf %16, %18 : vector<32x16xf32>
      %cst_19 = arith.constant 0.000000e+00 : f32
      %20 = vector.broadcast %cst_19 : f32 to vector<32x16xf32>
      %21 = arith.maximumf %19, %20 : vector<32x16xf32>
      %22 = arith.truncf %21 : vector<32x16xf32> to vector<32x16xbf16>
      %c0_20 = arith.constant 0 : index
      %c0_21 = arith.constant 0 : index
      %23 = vector.load %arg7[%c0_20, %c0_21] : memref<32x16xbf16, #tpu.memory_space<vmem>>, vector<32x16xbf16>
      tpu.vector_store %arg7[%c0_20, %c0_21], %22 {strides = array<i32>} : memref<32x16xbf16, #tpu.memory_space<vmem>>, vector<32x16xbf16>,
    } else {
    }
    return
  }
  func.func @transform_0(%arg0: i32, %arg1: i32) -> (i32, i32) {
    %c0_i32 = arith.constant 0 : i32
    return %arg0, %arg1 : i32, i32
  }
  func.func @transform_1(%arg0: i32, %arg1: i32) -> (i32, i32) {
    %c0_i32 = arith.constant 0 : i32
    return %arg0, %arg1 : i32, i32
  }
  func.func @transform_2(%arg0: i32, %arg1: i32) -> (i32, i32) {
    %c0_i32 = arith.constant 0 : i32
    %c0_i32_0 = arith.constant 0 : i32
    return %arg1, %c0_i32 : i32, i32
  }
  func.func @transform_3(%arg0: i32, %arg1: i32) -> (i32, i32) {
    %c0_i32 = arith.constant 0 : i32
    %c0_i32_0 = arith.constant 0 : i32
    return %arg1, %c0_i32 : i32, i32
  }
  func.func @transform_4(%arg0: i32, %arg1: i32) -> (i32, i32) {
    %c0_i32 = arith.constant 0 : i32
    %c0_i32_0 = arith.constant 0 : i32
    %c0_i32_1 = arith.constant 0 : i32
    return %c0_i32, %c0_i32_0 : i32, i32
  }
  func.func @transform_5(%arg0: i32, %arg1: i32) -> (i32, i32) {
    %c0_i32 = arith.constant 0 : i32
    %c0_i32_0 = arith.constant 0 : i32
    return %arg0, %c0_i32 : i32, i32
  }
}

</mosaic_0001>

<llo_original>
// kernel: cdown_forward.1
$region0: #{cdown_forward.1}
  #allocation0 [shape = 'u32[]', space=smem, size = 0x4, offset = 0x4, fixed_abs, tag = 'smem constant byte address 0x4 - core index']
  #allocation1 [shape = 'u32[72,128]{1,0:T(1,128)}', space=vmem, size = 0x9000, scoped, tag = 'internal scratch']
  #allocation2 [shape = 'f32[32,16]{1,0:T(8,128)}', space=vmem, size = 0x4000, scoped, tag = 'scratch operand']
  %s0 = inlined_call_operand.vmem [shape: bf16[128,36], index: 0, kind: input, shape index: {}]
  %s1 = inlined_call_operand.vmem [shape: bf16[128,36], index: 1, kind: input, shape index: {}]
  %s2 = inlined_call_operand.vmem [shape: bf16[36,16], index: 2, kind: input, shape index: {}]
  %s3 = inlined_call_operand.vmem [shape: bf16[36,16], index: 3, kind: input, shape index: {}]
  %s4 = inlined_call_operand.vmem [shape: f32[1,16], index: 4, kind: input, shape index: {}]
  %s5 = inlined_call_operand.vmem [shape: bf16[128,16], index: 5, kind: output, shape index: {}]
  %s6 = sld [smem:[#allocation0]]
  $region61: #{cdown_forward.1} parent=0
    _
  %s8 = ssub.s32 1, %s6
  %s9 = scalar_select 0, %s8, %s6
  loop: start=0, step=1, limit=6
  $region2: #{cdown_forward.1} parent=0 // loop_pre_header
    _
  $region3: #{cdown_forward.1} parent=0 // loop_header
    %s11 = sphi 0, %s15
    %p12 = scmp.ge.s32.totalorder %s11, 6
    %s18 = sphi 0, %s30
    %s19 = sphi 0, %s26
    %s20 = sphi 0, %s18
    %s21 = sphi 0, %s19
    %s22 = sphi 0, %s20
    %s23 = sphi 0, %s21
    %s35 = sphi 0, %s37
    %s38 = sphi 0, %s35
    %s39 = sphi 0, %s38
    %s55 = sphi 0, %s39
    %s63 = sphi 0, %s65
    %s66 = sphi 0, %s63
    %s67 = sphi 0, %s66
    %s83 = sphi 0, %s67
    %s89 = sphi 0, %s91
    %s92 = sphi 0, %s89
    %s93 = sphi 0, %s92
    %s109 = sphi 0, %s93
    %s115 = sphi 0, %s117
    %s118 = sphi 0, %s115
    %s119 = sphi 0, %s118
    %s135 = sphi 0, %s119
    %s139 = sphi 0, %s139
    %s141 = sphi 0, %s139
    %s142 = sphi 0, %s141
    %s156 = sphi 0, %s142
    %s162 = sphi 0, %s164
    %s165 = sphi 0, %s162
    %s166 = sphi 0, %s165
    %s182 = sphi 0, %s166
  $region4: #{cdown_forward.1} parent=0 // loop_header_branch
    %14 = sbr.rel (%p12) target = $region8
  $region5: #{cdown_forward.1} parent=0 // loop_body
    %s16 = ssub.s32 %s11, 1
    %s17 = ssub.s32 %s11, 2
    %s24 = sadd.s32 1, %s19
    %p25 = scmp.ge.s32.totalorder %s24, 1
    %s26 = scalar_select %p25, 0, %s24
    %s27 = sadd.s32 1, %s18
    %s28 = scalar_select %p25, %s27, %s18
    %p29 = scmp.ge.s32.totalorder %s28, 4
    %s30 = scalar_select %p29, 0, %s28
    %s31 = ssub.s32 %s18, %s30
    %s32 = ssub.s32 %s19, %s26
    %s33 = sor.u32 %s31, %s32
    %p34 = scmp.eq.s32.totalorder %s33, 0
    %s36 = sadd.s32 %s35, 1
    %s37 = scalar_select %p34, %s35, %s36
    %p40 = pneg %p34
    %p41 = scmp.eq.s32.totalorder %s11, 3
    %p42 = por %p40, %p41
    %p43 = scmp.ne.s32.totalorder %s35, %s38
    %p44 = scmp.eq.s32.totalorder %s11, 0
    %p45 = por %p43, %p44
    %p46 = scmp.ne.s32.totalorder %s35, %s38
    %p47 = scmp.eq.s32.totalorder %s16, 3
    %p48 = por %p46, %p47
    %p49 = scmp.ne.s32.totalorder %s38, %s39
    %p50 = scmp.eq.s32.totalorder %s16, 0
    %p51 = por %p49, %p50
    %p52 = scmp.ne.s32.totalorder %s38, %s39
    %p53 = scmp.eq.s32.totalorder %s17, 3
    %p54 = por %p52, %p53
    %p56 = scmp.ne.s32.totalorder %s39, %s55
    %p57 = scmp.eq.s32.totalorder %s17, 0
    %p58 = por %p56, %p57
    %s59 = ssub.s32 %s18, %s30
    %s60 = ssub.s32 %s19, %s26
    %s61 = sor.u32 %s59, %s60
    %p62 = scmp.eq.s32.totalorder %s61, 0
    %s64 = sadd.s32 %s63, 1
    %s65 = scalar_select %p62, %s63, %s64
    %p68 = pneg %p62
    %p69 = scmp.eq.s32.totalorder %s11, 3
    %p70 = por %p68, %p69
    %p71 = scmp.ne.s32.totalorder %s63, %s66
    %p72 = scmp.eq.s32.totalorder %s11, 0
    %p73 = por %p71, %p72
    %p74 = scmp.ne.s32.totalorder %s63, %s66
    %p75 = scmp.eq.s32.totalorder %s16, 3
    %p76 = por %p74, %p75
    %p77 = scmp.ne.s32.totalorder %s66, %s67
    %p78 = scmp.eq.s32.totalorder %s16, 0
    %p79 = por %p77, %p78
    %p80 = scmp.ne.s32.totalorder %s66, %s67
    %p81 = scmp.eq.s32.totalorder %s17, 3
    %p82 = por %p80, %p81
    %p84 = scmp.ne.s32.totalorder %s67, %s83
    %p85 = scmp.eq.s32.totalorder %s17, 0
    %p86 = por %p84, %p85
    %s87 = ssub.s32 %s19, %s26
    %p88 = scmp.eq.s32.totalorder %s87, 0
    %s90 = sadd.s32 %s89, 1
    %s91 = scalar_select %p88, %s89, %s90
    %p94 = pneg %p88
    %p95 = scmp.eq.s32.totalorder %s11, 3
    %p96 = por %p94, %p95
    %p97 = scmp.ne.s32.totalorder %s89, %s92
    %p98 = scmp.eq.s32.totalorder %s11, 0
    %p99 = por %p97, %p98
    %p100 = scmp.ne.s32.totalorder %s89, %s92
    %p101 = scmp.eq.s32.totalorder %s16, 3
    %p102 = por %p100, %p101
    %p103 = scmp.ne.s32.totalorder %s92, %s93
    %p104 = scmp.eq.s32.totalorder %s16, 0
    %p105 = por %p103, %p104
    %p106 = scmp.ne.s32.totalorder %s92, %s93
    %p107 = scmp.eq.s32.totalorder %s17, 3
    %p108 = por %p106, %p107
    %p110 = scmp.ne.s32.totalorder %s93, %s109
    %p111 = scmp.eq.s32.totalorder %s17, 0
    %p112 = por %p110, %p111
    %s113 = ssub.s32 %s19, %s26
    %p114 = scmp.eq.s32.totalorder %s113, 0
    %s116 = sadd.s32 %s115, 1
    %s117 = scalar_select %p114, %s115, %s116
    %p120 = pneg %p114
    %p121 = scmp.eq.s32.totalorder %s11, 3
    %p122 = por %p120, %p121
    %p123 = scmp.ne.s32.totalorder %s115, %s118
    %p124 = scmp.eq.s32.totalorder %s11, 0
    %p125 = por %p123, %p124
    %p126 = scmp.ne.s32.totalorder %s115, %s118
    %p127 = scmp.eq.s32.totalorder %s16, 3
    %p128 = por %p126, %p127
    %p129 = scmp.ne.s32.totalorder %s118, %s119
    %p130 = scmp.eq.s32.totalorder %s16, 0
    %p131 = por %p129, %p130
    %p132 = scmp.ne.s32.totalorder %s118, %s119
    %p133 = scmp.eq.s32.totalorder %s17, 3
    %p134 = por %p132, %p133
    %p136 = scmp.ne.s32.totalorder %s119, %s135
    %p137 = scmp.eq.s32.totalorder %s17, 0
    %p138 = por %p136, %p137
    %s140 = sadd.s32 %s139, 1
    %p143 = scmp.eq.s32.totalorder %s11, 3
    %p144 = scmp.ne.s32.totalorder %s139, %s141
    %p145 = scmp.eq.s32.totalorder %s11, 0
    %p146 = por %p144, %p145
    %p147 = scmp.ne.s32.totalorder %s139, %s141
    %p148 = scmp.eq.s32.totalorder %s16, 3
    %p149 = por %p147, %p148
    %p150 = scmp.ne.s32.totalorder %s141, %s142
    %p151 = scmp.eq.s32.totalorder %s16, 0
    %p152 = por %p150, %p151
    %p153 = scmp.ne.s32.totalorder %s141, %s142
    %p154 = scmp.eq.s32.totalorder %s17, 3
    %p155 = por %p153, %p154
    %p157 = scmp.ne.s32.totalorder %s142, %s156
    %p158 = scmp.eq.s32.totalorder %s17, 0
    %p159 = por %p157, %p158
    %s160 = ssub.s32 %s18, %s30
    %p161 = scmp.eq.s32.totalorder %s160, 0
    %s163 = sadd.s32 %s162, 1
    %s164 = scalar_select %p161, %s162, %s163
    %p167 = pneg %p161
    %p168 = scmp.eq.s32.totalorder %s11, 3
    %p169 = por %p167, %p168
    %p170 = scmp.ne.s32.totalorder %s162, %s165
    %p171 = scmp.eq.s32.totalorder %s11, 0
    %p172 = por %p170, %p171
    %p173 = scmp.ne.s32.totalorder %s162, %s165
    %p174 = scmp.eq.s32.totalorder %s16, 3
    %p175 = por %p173, %p174
    %p176 = scmp.ne.s32.totalorder %s165, %s166
    %p177 = scmp.eq.s32.totalorder %s16, 0
    %p178 = por %p176, %p177
    %p179 = scmp.ne.s32.totalorder %s165, %s166
    %p180 = scmp.eq.s32.totalorder %s17, 3
    %p181 = por %p179, %p180
    %p183 = scmp.ne.s32.totalorder %s166, %s182
    %p184 = scmp.eq.s32.totalorder %s17, 0
    %p185 = por %p183, %p184
    %p186 = scmp.le.s32.totalorder 1, %s11
    %p187 = scmp.lt.s32.totalorder %s11, 5
    %p188 = pnand %p186, %p187
    %p189 = pneg %p188
    // Predicated region
    $region9: #{cdown_forward.1} parent=5 // pred_check
      _
    $region10: #{cdown_forward.1} parent=5 // pred_check_branch
      %191 = sbr.rel (%p188) target = $region12
    $region11: #{cdown_forward.1} parent=5 // pred_region
      %s192 = ssub.s32 %s11, 1
      // Predicated region
      $region13: #{cdown_forward.1} parent=11 // pred_check
        %p193 = pneg %p105
      $region14: #{cdown_forward.1} parent=11 // pred_check_branch
        %195 = sbr.rel (%p193) target = $region16
      $region15: #{cdown_forward.1} parent=11 // pred_region
        %s196 = smul.u32 5, %s21
        %p197 = scmp.lt.s32.totalorder %s196, 4
        %s198 = scalar_select %p197, %s196, 4
        %s199 = smul.addr %s198, 4
        %s200 = scalar_lea.vmem %s2, %s199
        %s201 = smul.u32 5, %s21
      $region16: #{cdown_forward.1} parent=11 // pred_fallthru
        _
      // Predicated region
      $region17: #{cdown_forward.1} parent=11 // pred_check
        %p202 = pneg %p131
      $region18: #{cdown_forward.1} parent=11 // pred_check_branch
        %204 = sbr.rel (%p202) target = $region20
      $region19: #{cdown_forward.1} parent=11 // pred_region
        %s205 = smul.u32 5, %s21
        %p206 = scmp.lt.s32.totalorder %s205, 4
        %s207 = scalar_select %p206, %s205, 4
        %s208 = smul.addr %s207, 4
        %s209 = scalar_lea.vmem %s3, %s208
        %s210 = smul.u32 5, %s21
      $region20: #{cdown_forward.1} parent=11 // pred_fallthru
        _
      // Predicated region
      $region21: #{cdown_forward.1} parent=11 // pred_check
        %p211 = pneg %p152
      $region22: #{cdown_forward.1} parent=11 // pred_check_branch
        %213 = sbr.rel (%p211) target = $region24
      $region23: #{cdown_forward.1} parent=11 // pred_region
        _
      $region24: #{cdown_forward.1} parent=11 // pred_fallthru
        _
    $region12: #{cdown_forward.1} parent=5 // pred_fallthru
      _
    %p214 = scmp.lt.s32.totalorder %s11, 4
    // Predicated region
    $region25: #{cdown_forward.1} parent=5 // pred_check
      %p215 = pneg %p214
    $region26: #{cdown_forward.1} parent=5 // pred_check_branch
      %217 = sbr.rel (%p215) target = $region28
    $region27: #{cdown_forward.1} parent=5 // pred_region
      // Predicated region
      $region29: #{cdown_forward.1} parent=27 // pred_check
        %p218 = pneg %p45
      $region30: #{cdown_forward.1} parent=27 // pred_check_branch
        %220 = sbr.rel (%p218) target = $region32
      $region31: #{cdown_forward.1} parent=27 // pred_region
        %s221 = smul.u32 4, %s18
        %p222 = scmp.lt.s32.totalorder %s221, 15
        %s223 = scalar_select %p222, %s221, 15
        %p224 = scmp.lt.s32.totalorder %s19, 0
        %s225 = scalar_select %p224, %s19, 0
        %s226 = sadd.s32 %s225, %s223
        %s227 = smul.addr %s226, 4
        %s228 = scalar_lea.vmem %s0, %s227
        %s229 = smul.u32 4, %s18
      $region32: #{cdown_forward.1} parent=27 // pred_fallthru
        _
      // Predicated region
      $region33: #{cdown_forward.1} parent=27 // pred_check
        %p230 = pneg %p73
      $region34: #{cdown_forward.1} parent=27 // pred_check_branch
        %232 = sbr.rel (%p230) target = $region36
      $region35: #{cdown_forward.1} parent=27 // pred_region
        %s233 = smul.u32 4, %s18
        %p234 = scmp.lt.s32.totalorder %s233, 15
        %s235 = scalar_select %p234, %s233, 15
        %p236 = scmp.lt.s32.totalorder %s19, 0
        %s237 = scalar_select %p236, %s19, 0
        %s238 = sadd.s32 %s237, %s235
        %s239 = smul.addr %s238, 4
        %s240 = scalar_lea.vmem %s1, %s239
        %s241 = smul.u32 4, %s18
      $region36: #{cdown_forward.1} parent=27 // pred_fallthru
        _
    $region28: #{cdown_forward.1} parent=5 // pred_fallthru
      _
    %p242 = scmp.le.s32.totalorder 1, %s11
    %p243 = scmp.lt.s32.totalorder %s11, 5
    %p244 = pnand %p242, %p243
    %p245 = pneg %p244
    // Predicated region
    $region37: #{cdown_forward.1} parent=5 // pred_check
      _
    $region38: #{cdown_forward.1} parent=5 // pred_check_branch
      %247 = sbr.rel (%p244) target = $region40
    $region39: #{cdown_forward.1} parent=5 // pred_region
      %s248 = ssub.s32 %s11, 1
      %s249 = smul.u32 4, %s20
      %p250 = scmp.lt.s32.totalorder %s249, 15
      %s251 = scalar_select %p250, %s249, 15
      %p252 = scmp.lt.s32.totalorder %s21, 0
      %s253 = scalar_select %p252, %s21, 0
      %s254 = sadd.s32 %s253, %s251
      %s255 = smul.addr %s254, 4
      %s256 = scalar_lea.vmem %s0, %s255
      %p257 = pneg %p51
      %p258 = pneg %p48
      %s259 = smul.u32 4, %s20
      %p260 = scmp.lt.s32.totalorder %s259, 15
      %s261 = scalar_select %p260, %s259, 15
      %p262 = scmp.lt.s32.totalorder %s21, 0
      %s263 = scalar_select %p262, %s21, 0
      %s264 = sadd.s32 %s263, %s261
      %s265 = smul.addr %s264, 4
      %s266 = scalar_lea.vmem %s1, %s265
      %p267 = pneg %p79
      %p268 = pneg %p76
      %s269 = smul.u32 5, %s21
      %p270 = scmp.lt.s32.totalorder %s269, 4
      %s271 = scalar_select %p270, %s269, 4
      %s272 = smul.addr %s271, 4
      %s273 = scalar_lea.vmem %s2, %s272
      %p274 = pneg %p105
      %p275 = pneg %p102
      %s276 = smul.u32 5, %s21
      %p277 = scmp.lt.s32.totalorder %s276, 4
      %s278 = scalar_select %p277, %s276, 4
      %s279 = smul.addr %s278, 4
      %s280 = scalar_lea.vmem %s3, %s279
      %p281 = pneg %p131
      %p282 = pneg %p128
      %p283 = pneg %p152
      %p284 = pneg %p149
      %p285 = pneg %p178
      %p286 = pneg %p175
      %s287 = smul.u32 4, %s20
      %p288 = scmp.lt.s32.totalorder %s287, 15
      %s289 = scalar_select %p288, %s287, 15
      %s290 = smul.addr %s289, 4
      %s291 = scalar_lea.vmem %s5, %s290
      %s292 = smul.u32 4, %s20
      %p293 = scmp.lt.s32.totalorder %s292, 15
      %s294 = scalar_select %p293, %s292, 15
      %p295 = scmp.lt.s32.totalorder %s21, 0
      %s296 = scalar_select %p295, %s21, 0
      %s297 = sadd.s32 %s296, %s294
      %s298 = smul.addr %s297, 4
      %s299 = scalar_lea.vmem %s0, %s298
      %s300 = smul.u32 4, %s20
      %s301 = smul.u32 4, %s20
      %p302 = scmp.lt.s32.totalorder %s301, 15
      %s303 = scalar_select %p302, %s301, 15
      %p304 = scmp.lt.s32.totalorder %s21, 0
      %s305 = scalar_select %p304, %s21, 0
      %s306 = sadd.s32 %s305, %s303
      %s307 = smul.addr %s306, 4
      %s308 = scalar_lea.vmem %s1, %s307
      %s309 = smul.u32 4, %s20
      %s310 = smul.u32 5, %s21
      %p311 = scmp.lt.s32.totalorder %s310, 4
      %s312 = scalar_select %p311, %s310, 4
      %s313 = smul.addr %s312, 4
      %s314 = scalar_lea.vmem %s2, %s313
      %s315 = smul.u32 5, %s21
      %s316 = smul.u32 5, %s21
      %p317 = scmp.lt.s32.totalorder %s316, 4
      %s318 = scalar_select %p317, %s316, 4
      %s319 = smul.addr %s318, 4
      %s320 = scalar_lea.vmem %s3, %s319
      %s321 = smul.u32 5, %s21
      %s322 = smul.u32 4, %s20
      %p323 = scmp.lt.s32.totalorder %s322, 15
      %s324 = scalar_select %p323, %s322, 15
      %s325 = smul.addr %s324, 4
      %s326 = scalar_lea.vmem %s5, %s325
      %s327 = smul.u32 4, %s20
      %p329 = scmp.eq.s32.totalorder %s21, 0
      // Predicated region
      $region41: #{cdown_forward.1} parent=39 // pred_check
        %p330 = pneg %p329
      $region42: #{cdown_forward.1} parent=39 // pred_check_branch
        %332 = sbr.rel (%p330) target = $region44
      $region43: #{cdown_forward.1} parent=39 // pred_region
        %vm333 = vcmask 130048
        %334 = vst.msk [vmem:[#allocation2] sm:$0xff] %vm333, 0.0
        %335 = vst.msk [vmem:[#allocation2 + $0x8] sm:$0xff] %vm333, 0.0
        %336 = vst.msk [vmem:[#allocation2 + $0x10] sm:$0xff] %vm333, 0.0
        %337 = vst.msk [vmem:[#allocation2 + $0x18] sm:$0xff] %vm333, 0.0
      $region44: #{cdown_forward.1} parent=39 // pred_fallthru
        _
      %v338 = vld [vmem:[#allocation2] sm:$0xff]
      %v339 = vld [vmem:[#allocation2 + $0x8] sm:$0xff]
      %v340 = vld [vmem:[#allocation2 + $0x10] sm:$0xff]
      %v341 = vld [vmem:[#allocation2 + $0x18] sm:$0xff]
      %v342 = vld [vmem:[%s299] sm:$0xf]
      %v343 = vld [vmem:[%s299 + $0x4] sm:$0xf]
      %v344 = vld [vmem:[%s299 + $0x8] sm:$0xf]
      %v345 = vld [vmem:[%s299 + $0xc] sm:$0xf]
      %v346 = vld [vmem:[%s314] sm:$0xf]
      %v347 = vld [vmem:[%s314 + $0x4] sm:$0xf]
      %v348 = vld [vmem:[%s314 + $0x8] sm:$0xf]
      %v349 = vld [vmem:[%s314 + $0xc] sm:$0xf]
      %v350 = vld [vmem:[%s314 + $0x10] sm:$0x3]
      %v351 = vld [vmem:[%s308] sm:$0xf]
      %v352 = vld [vmem:[%s308 + $0x4] sm:$0xf]
      %v353 = vld [vmem:[%s308 + $0x8] sm:$0xf]
      %v354 = vld [vmem:[%s308 + $0xc] sm:$0xf]
      %v355 = vld [vmem:[%s320] sm:$0xf]
      %v356 = vld [vmem:[%s320 + $0x4] sm:$0xf]
      %v357 = vld [vmem:[%s320 + $0x8] sm:$0xf]
      %v358 = vld [vmem:[%s320 + $0xc] sm:$0xf]
      %v359 = vld [vmem:[%s320 + $0x10] sm:$0x3]
      %v364 = vunpack.c.l.b16 %v351
      %v365 = vunpack.c.l.b16 %v352
      %v366 = vunpack.c.l.b16 %v353
      %v367 = vunpack.c.l.b16 %v354
      %v368 = vpack.c.b16 %v365, %v364
      %v369 = vpack.c.b16 %v367, %v366
      %v375 = vunpack.c.l.b16 %v355
      %v376 = vunpack.c.l.b16 %v356
      %v377 = vunpack.c.l.b16 %v357
      %v378 = vunpack.c.l.b16 %v358
      %v379 = vunpack.c.l.b16 %v359
      %v380 = vpack.c.b16 %v376, %v375
      %v381 = vpack.c.b16 %v378, %v377
      %v382 = vpack.c.b16 %v379, %v379
      %vm385 = vcmask 293888
      %v387 = vsel %vm385, %v368, 0
      %v390 = vsel %vm385, %v369, 0
      %vm392 = vcmask 1041408
      %v394 = vsel %vm392, %v382, 0
      %396 = vmatpush.bf16.msra.mxu0 0
      %397 = vmatpush.bf16.msra.mxu0 0
      %398 = vmatpush.bf16.msra.mxu0 0
      %399 = vmatpush.bf16.msra.mxu0 0
      %400 = vmatpush.bf16.msra.mxu0 0
      %401 = vmatpush.bf16.msra.mxu0 %v394
      %402 = vmatpush.bf16.msra.mxu0 %v381
      %403 = vmatpush.bf16.msra.mxu0 %v380
      %404 = vmatmul.bf16.gmra.mxu0 %v387
      %v405 = vpop.f32.mrf.mxu0
      %v406 = vadd.f32 0.0, %v405
      %v407 = vpop.f32.mrf.mxu0
      %v408 = vadd.f32 0.0, %v407
      %409 = vmatmul.bf16.gmra.mxu0 %v390
      %v410 = vpop.f32.mrf.mxu0
      %v411 = vadd.f32 0.0, %v410
      %v412 = vpop.f32.mrf.mxu0
      %v413 = vadd.f32 0.0, %v412
      %414 = vdwg.mxu0
      %v419 = vunpack.c.l.b16 %v342
      %v420 = vunpack.c.l.b16 %v343
      %v421 = vunpack.c.l.b16 %v344
      %v422 = vunpack.c.l.b16 %v345
      %v423 = vpack.c.b16 %v420, %v419
      %v424 = vpack.c.b16 %v422, %v421
      %v430 = vunpack.c.l.b16 %v346
      %v431 = vunpack.c.l.b16 %v347
      %v432 = vunpack.c.l.b16 %v348
      %v433 = vunpack.c.l.b16 %v349
      %v434 = vunpack.c.l.b16 %v350
      %v435 = vpack.c.b16 %v431, %v430
      %v436 = vpack.c.b16 %v433, %v432
      %v437 = vpack.c.b16 %v434, %v434
      %v441 = vsel %vm385, %v423, 0
      %v444 = vsel %vm385, %v424, 0
      %v447 = vsel %vm392, %v437, 0
      %449 = vmatpush.bf16.msra.mxu0 0
      %450 = vmatpush.bf16.msra.mxu0 0
      %451 = vmatpush.bf16.msra.mxu0 0
      %452 = vmatpush.bf16.msra.mxu0 0
      %453 = vmatpush.bf16.msra.mxu0 0
      %454 = vmatpush.bf16.msra.mxu0 %v447
      %455 = vmatpush.bf16.msra.mxu0 %v436
      %456 = vmatpush.bf16.msra.mxu0 %v435
      %457 = vmatmul.bf16.gmra.mxu0 %v441
      %v458 = vpop.f32.mrf.mxu0
      %v459 = vadd.f32 %v406, %v458
      %v460 = vpop.f32.mrf.mxu0
      %v461 = vadd.f32 %v408, %v460
      %462 = vmatmul.bf16.gmra.mxu0 %v444
      %v463 = vpop.f32.mrf.mxu0
      %v464 = vadd.f32 %v411, %v463
      %v465 = vpop.f32.mrf.mxu0
      %v466 = vadd.f32 %v413, %v465
      %467 = vdwg.mxu0
      %v468 = vadd.f32 %v338, %v459
      %v469 = vadd.f32 %v339, %v461
      %v470 = vadd.f32 %v340, %v464
      %v471 = vadd.f32 %v341, %v466
      %vm472 = vcmask 130048
      %473 = vst.msk [vmem:[#allocation2] sm:$0xff] %vm472, %v468
      %474 = vst.msk [vmem:[#allocation2 + $0x8] sm:$0xff] %vm472, %v469
      %475 = vst.msk [vmem:[#allocation2 + $0x10] sm:$0xff] %vm472, %v470
      %476 = vst.msk [vmem:[#allocation2 + $0x18] sm:$0xff] %vm472, %v471
      // Predicated region
      $region45: #{cdown_forward.1} parent=39 // pred_check
        %p477 = pneg %p329
      $region46: #{cdown_forward.1} parent=39 // pred_check_branch
        %479 = sbr.rel (%p477) target = $region48
      $region47: #{cdown_forward.1} parent=39 // pred_region
        %v480 = vld [vmem:[#allocation2] sm:$0xff]
        %v481 = vld [vmem:[#allocation2 + $0x8] sm:$0xff]
        %v482 = vld [vmem:[#allocation2 + $0x10] sm:$0xff]
        %v483 = vld [vmem:[#allocation2 + $0x18] sm:$0xff]
        %v484 = vld [vmem:[%s4] sm:$0x1]
        %v486 = vperm.slane %v484, 0
        %v488 = vadd.f32 %v480, %v486
        %v489 = vadd.f32 %v481, %v486
        %v490 = vadd.f32 %v482, %v486
        %v491 = vadd.f32 %v483, %v486
        %v492 = vmax.f32 %v488, 0.0
        %v493 = vmax.f32 %v489, 0.0
        %v494 = vmax.f32 %v490, 0.0
        %v495 = vmax.f32 %v491, 0.0
        %v496 = vpack.c.bf16 %v492, %v492
        %v497 = vpack.c.bf16 %v493, %v493
        %v498 = vpack.c.bf16 %v494, %v494
        %v499 = vpack.c.bf16 %v495, %v495
        %vm500 = vcmask 125952
        %501 = vst.msk [vmem:[%s326] sm:$0xf] %vm500, %v496
        %502 = vst.msk [vmem:[%s326 + $0x4] sm:$0xf] %vm500, %v497
        %503 = vst.msk [vmem:[%s326 + $0x8] sm:$0xf] %vm500, %v498
        %504 = vst.msk [vmem:[%s326 + $0xc] sm:$0xf] %vm500, %v499
      $region48: #{cdown_forward.1} parent=39 // pred_fallthru
        _
      %s505 = smul.u32 4, %s20
      %p506 = scmp.lt.s32.totalorder %s505, 15
      %s507 = scalar_select %p506, %s505, 15
      %s508 = smul.addr %s507, 4
      %s509 = scalar_lea.vmem %s5, %s508
      // Predicated region
      $region49: #{cdown_forward.1} parent=39 // pred_check
        %p510 = pneg %p175
      $region50: #{cdown_forward.1} parent=39 // pred_check_branch
        %512 = sbr.rel (%p510) target = $region52
      $region51: #{cdown_forward.1} parent=39 // pred_region
        %s513 = smul.u32 4, %s20
      $region52: #{cdown_forward.1} parent=39 // pred_fallthru
        _
    $region40: #{cdown_forward.1} parent=5 // pred_fallthru
      _
    %p514 = scmp.le.s32.totalorder 2, %s11
    // Predicated region
    $region53: #{cdown_forward.1} parent=5 // pred_check
      %p515 = pneg %p514
    $region54: #{cdown_forward.1} parent=5 // pred_check_branch
      %517 = sbr.rel (%p515) target = $region56
    $region55: #{cdown_forward.1} parent=5 // pred_region
      %s518 = ssub.s32 %s11, 2
      // Predicated region
      $region57: #{cdown_forward.1} parent=55 // pred_check
        %p519 = pneg %p181
      $region58: #{cdown_forward.1} parent=55 // pred_check_branch
        %521 = sbr.rel (%p519) target = $region60
      $region59: #{cdown_forward.1} parent=55 // pred_region
        %s522 = smul.u32 4, %s22
        %p523 = scmp.lt.s32.totalorder %s522, 15
        %s524 = scalar_select %p523, %s522, 15
        %s525 = smul.addr %s524, 4
        %s526 = scalar_lea.vmem %s5, %s525
      $region60: #{cdown_forward.1} parent=55 // pred_fallthru
        _
    $region56: #{cdown_forward.1} parent=5 // pred_fallthru
      _
  $region6: #{cdown_forward.1} parent=0 // loop_footer
    %s15 = sadd.s32 1, %s11
  $region7: #{cdown_forward.1} parent=0 // loop_footer_branch
    %10 = sbr.rel target = $region3
  $region8: #{cdown_forward.1} parent=0 // loop_exit
    _

</llo_original>
